<compile_context>
chip_gen: v6e
topology: v6e:2x2x1
jax: 0.10.0
libtpu: 0.0.40
codegen_flags: <defaults>
</compile_context>

<pallas_src>
import functools

import jax
import jax.numpy as jnp
from jax.experimental import pallas as pl
from jax.experimental.pallas import tpu as pltpu


def _round_up(n, m):
    return ((n + m - 1) // m) * m


def _linear_conv_kernel(x_ref, buf1_ref, buf2_ref, o_ref, *, cl, c16o, s3_row, b4_row):
    # buf1: [ w13 (C*L, 16C*O) ; s3 (1, 16C*O) at row s3_row ]   (tile-aligned)
    # buf2: [ w4  (16C*O, 128) ; b4 (1, 128)  at row b4_row  ]   (tile-aligned)
    w13 = buf1_ref[0:cl, :]                       # (C*L, 16C*O)
    s3 = buf1_ref[s3_row:s3_row + 1, :]           # (1, 16C*O)
    w4 = buf2_ref[0:c16o, :]                      # (16C*O, 128)
    b4 = buf2_ref[b4_row:b4_row + 1, :]           # (1, 128)

    # Fused split_linear0 -> linear1 -> linear2 -> cbs3-conv (+BN scale/shift,
    # + series_last handling) as ONE MXU matmul for the whole batch.
    z = jnp.dot(x_ref[...], w13, preferred_element_type=jnp.float32) + s3
    z = z * jax.nn.sigmoid(z)                     # SiLU (f32 on EUP/VPU)

    # conv4 (k=1) as a matmul; lane-dense (B, 128) store.
    o_ref[...] = jnp.dot(z, w4, preferred_element_type=jnp.float32) + b4


def fuse_params(p, n_pad=128):
    """One-time folding of all module parameters into two packed weight slabs.

    Done in f32 with HIGHEST precision so the fused path stays within the
    1e-4 tolerance of the unfused reference.
    """
    hi = jax.lax.Precision.HIGHEST
    C, L, _ = p["w0t"].shape
    O = p["w2t"].shape[1]
    C16 = p["w3"].shape[0]
    out_dim = p["w4"].shape[0]

    # --- split_linear0 @ linear1 @ linear2 (no nonlinearity in between) ----
    wf = jnp.einsum("clm,mn,no->clo", p["w0t"], p["w1t"], p["w2t"],
                    precision=hi)                                  # (C, L, O)
    bf = jnp.einsum("cm,mn,no->co", p["b0"], p["w1t"], p["w2t"], precision=hi)
    bf = bf + jnp.einsum("n,no->o", p["b1"], p["w2t"], precision=hi)[None]
    bf = bf + p["b2"][None]                                        # (C, O)

    # Fold "x - series_last ... + series_last":
    #   (x - last) @ wf + last == x @ wf2 with wf2[:, L-1, :] += 1 - sum_l wf
    wf2 = wf.at[:, L - 1, :].add(1.0 - jnp.sum(wf, axis=1))        # (C, L, O)

    # --- cbs3: fold BatchNorm (eval) into the conv weight / shift ----------
    scale = p["bn_gamma"] / jnp.sqrt(p["bn_var"] + 1e-5)           # (C16,)
    w3p = p["w3"] * scale[:, None]                                 # (C16, C)
    bn_shift = p["bn_beta"] - p["bn_mean"] * scale                 # (C16,)

    # --- fold the (block-diagonal) linear chain straight into cbs3's conv --
    # w13[c*L + l, x*O + j] = wf2[c, l, j] * w3p[x, c]
    w13 = jnp.einsum("clj,xc->clxj", wf2, w3p,
                     precision=hi).reshape(C * L, C16 * O)         # (C*L, 16C*O)
    # Linear-chain bias pushed through the conv + BN shift -> one additive row.
    s3 = (jnp.einsum("xc,co->xo", w3p, bf, precision=hi)
          + bn_shift[:, None]).reshape(1, C16 * O)                 # (1, 16C*O)

    # --- conv4 (k=1) as a matmul; zero-pad N from out_dim*O up to 128 ------
    eye = jnp.eye(O, dtype=jnp.float32)
    w4big = jnp.einsum("dx,ij->xidj", p["w4"], eye).reshape(C16 * O, out_dim * O)
    b4big = jnp.repeat(p["b4"], O).reshape(1, out_dim * O)
    w4pad = jnp.zeros((C16 * O, n_pad), jnp.float32).at[:, :out_dim * O].set(w4big)
    b4pad = jnp.zeros((1, n_pad), jnp.float32).at[:, :out_dim * O].set(b4big)

    # --- pack constants into two tile-aligned slabs (fewer, bigger DMAs) ---
    s3_row = _round_up(C * L, 8)
    buf1 = jnp.zeros((s3_row + 8, C16 * O), jnp.float32)
    buf1 = buf1.at[:C * L, :].set(w13).at[s3_row:s3_row + 1, :].set(s3)

    b4_row = _round_up(C16 * O, 8)
    buf2 = jnp.zeros((b4_row + 8, n_pad), jnp.float32)
    buf2 = buf2.at[:C16 * O, :].set(w4pad).at[b4_row:b4_row + 1, :].set(b4pad)

    return {
        "buf1": buf1,                    # (C*L [+pad] + 8, 16C*O)
        "buf2": buf2,                    # (16C*O [+pad] + 8, 128)
        "dims": (C, L, O, out_dim),      # static ints for the wrapper/kernel
        "rows": (s3_row, b4_row),
        "n_pad": n_pad,
    }


def linear_conv_forward(x, fused):
    B, C, L = x.shape
    _, _, O, out_dim = fused["dims"]
    s3_row, b4_row = fused["rows"]
    n_pad = fused["n_pad"]
    c16o = 16 * C * O

    x_flat = x.reshape(B, C * L)         # contiguous reshape, done in XLA

    kernel = functools.partial(_linear_conv_kernel,
                               cl=C * L, c16o=c16o,
                               s3_row=s3_row, b4_row=b4_row)

    vmem = lambda: pl.BlockSpec(memory_space=pltpu.MemorySpace.VMEM)
    out_pad = pl.pallas_call(
        kernel,
        out_shape=jax.ShapeDtypeStruct((B, n_pad), jnp.float32),
        in_specs=[vmem(), vmem(), vmem()],
        out_specs=vmem(),
    )(x_flat, fused["buf1"], fused["buf2"])

    # Lane-padded (B, 128) -> (B, out_dim, O); slice is free in XLA.
    return out_pad[:, :out_dim * O].reshape(B, out_dim, O)


def _reference(x, p):
    """Pure-JAX reference of the original (unfused) forward pass."""
    last = x[:, :, -1:]
    xd = x - last
    y0 = jnp.einsum("bcl,clm->bcm", xd, p["w0t"]) + p["b0"][None]
    y1 = y0 @ p["w1t"] + p["b1"]
    y2 = y1 @ p["w2t"] + p["b2"]
    y2 = y2 + last
    scale = p["bn_gamma"] / jnp.sqrt(p["bn_var"] + 1e-5)
    shift = p["bn_beta"] - p["bn_mean"] * scale
    z = jnp.einsum("xc,bct->bxt", p["w3"], y2)
    z = z * scale[None, :, None] + shift[None, :, None]
    z = z * jax.nn.sigmoid(z)
    out = jnp.einsum("dx,bxt->bdt", p["w4"], z) + p["b4"][None, :, None]
    return out


def make_params(key, input_dim, output_dim, input_size, output_size):
    C, L, O = input_dim, input_size, output_size
    C16 = 16 * C
    ks = jax.random.split(key, 13)
    u = lambda k, shape, fan: jax.random.uniform(
        k, shape, jnp.float32, -1.0 / jnp.sqrt(fan), 1.0 / jnp.sqrt(fan))
    return {
        # Linear / conv weights stored pre-transposed (in, out) where relevant.
        "w0t": u(ks[0], (C, L, L), L),            # split_linear0 (per-channel)
        "b0":  u(ks[1], (C, L), L),
        "w1t": u(ks[2], (L, L), L),               # linear1
        "b1":  u(ks[3], (L,), L),
        "w2t": u(ks[4], (L, O), L),               # linear2
        "b2":  u(ks[5], (O,), L),
        "w3":  u(ks[6], (C16, C), C),             # cbs3 conv (k=1, no bias)
        "w4":  u(ks[7], (output_dim, C16), C16),  # conv4 (k=1)
        "b4":  u(ks[8], (output_dim,), C16),
        # BatchNorm1d (eval) affine + running stats.
        "bn_gamma": 1.0 + 0.1 * jax.random.normal(ks[9], (C16,), jnp.float32),
        "bn_beta":  0.1 * jax.random.normal(ks[10], (C16,), jnp.float32),
        "bn_mean":  0.1 * jax.random.normal(ks[11], (C16,), jnp.float32),
        "bn_var":   1.0 + 0.1 * jnp.abs(jax.random.normal(ks[12], (C16,), jnp.float32)),
    }


if __name__ == "__main__":
    # args.input_column -> input_dim=4, args.output_column -> output_dim=2,
    # args.input_size=16, args.output_size=8; batch=2.
    B, input_dim, output_dim, input_size, output_size = 2, 4, 2, 16, 8

    key = jax.random.PRNGKey(0)
    kx, kp = jax.random.split(key)
    x = jax.random.normal(kx, (B, input_dim, input_size), jnp.float32)
    params = make_params(kp, input_dim, output_dim, input_size, output_size)

    fused = fuse_params(params)
    out = linear_conv_forward(x, fused)
    out = jax.block_until_ready(out)

    ref = _reference(x, params)
    assert out.shape == (B, output_dim, output_size)
    assert jnp.allclose(out, ref, atol=1e-4, rtol=1e-4), "mismatch vs reference"

    print("KERNEL_OK")
</pallas_src>

<mosaic_0001>
module attributes {stable_mosaic.version = 11 : i64} {
  func.func @_linear_conv_kernel(%arg0: memref<2x64xf32, #tpu.memory_space<vmem>>, %arg1: memref<72x512xf32, #tpu.memory_space<vmem>>, %arg2: memref<520x128xf32, #tpu.memory_space<vmem>>, %arg3: memref<2x128xf32, #tpu.memory_space<vmem>>) attributes {dimension_semantics = [], scalar_prefetch = 0 : i64, scratch_operands = 0 : i64, tpu.core_type = #tpu.core_type<tc>} {
    %c0 = arith.constant 0 : index
    %c0_0 = arith.constant 0 : index
    %0 = vector.load %arg1[%c0, %c0_0] : memref<72x512xf32, #tpu.memory_space<vmem>>, vector<64x512xf32>
    %c64 = arith.constant 64 : index
    %c0_1 = arith.constant 0 : index
    %1 = vector.load %arg1[%c64, %c0_1] : memref<72x512xf32, #tpu.memory_space<vmem>>, vector<1x512xf32>
    %c0_2 = arith.constant 0 : index
    %c0_3 = arith.constant 0 : index
    %2 = vector.load %arg2[%c0_2, %c0_3] : memref<520x128xf32, #tpu.memory_space<vmem>>, vector<512x128xf32>
    %c512 = arith.constant 512 : index
    %c0_4 = arith.constant 0 : index
    %3 = vector.load %arg2[%c512, %c0_4] : memref<520x128xf32, #tpu.memory_space<vmem>>, vector<1x128xf32>
    %c0_5 = arith.constant 0 : index
    %c0_6 = arith.constant 0 : index
    %4 = vector.load %arg0[%c0_5, %c0_6] : memref<2x64xf32, #tpu.memory_space<vmem>>, vector<2x64xf32>
    %cst = arith.constant dense<0.000000e+00> : vector<2x512xf32>
    %5 = tpu.matmul %4, %0, %cst {dimension_numbers = #tpu.dot_dimension_numbers<[1], [0], [0], [1], [0, 0, 1, 1], [], []>} : vector<2x64xf32>, vector<64x512xf32>, vector<2x512xf32> -> vector<2x512xf32>
    %6 = vector.broadcast %1 : vector<1x512xf32> to vector<2x512xf32>
    %7 = arith.addf %5, %6 : vector<2x512xf32>
    %8 = arith.negf %7 : vector<2x512xf32>
    %9 = math.exp %8 : vector<2x512xf32>
    %cst_7 = arith.constant 1.000000e+00 : f32
    %10 = vector.broadcast %cst_7 : f32 to vector<2x512xf32>
    %11 = arith.addf %10, %9 : vector<2x512xf32>
    %12 = arith.divf %10, %11 : vector<2x512xf32>
    %13 = arith.mulf %7, %12 : vector<2x512xf32>
    %cst_8 = arith.constant dense<0.000000e+00> : vector<2x128xf32>
    %14 = tpu.matmul %13, %2, %cst_8 {dimension_numbers = #tpu.dot_dimension_numbers<[1], [0], [0], [1], [0, 0, 1, 1], [], []>} : vector<2x512xf32>, vector<512x128xf32>, vector<2x128xf32> -> vector<2x128xf32>
    %15 = vector.broadcast %3 : vector<1x128xf32> to vector<2x128xf32>
    %16 = arith.addf %14, %15 : vector<2x128xf32>
    %c0_9 = arith.constant 0 : index
    %c0_10 = arith.constant 0 : index
    %17 = vector.load %arg3[%c0_9, %c0_10] : memref<2x128xf32, #tpu.memory_space<vmem>>, vector<2x128xf32>
    tpu.vector_store %arg3[%c0_9, %c0_10], %16 {strides = array<i32>} : memref<2x128xf32, #tpu.memory_space<vmem>>, vector<2x128xf32>,
    return
  }
}

</mosaic_0001>

<llo_original>
// kernel: tpu_custom_call.1
$region0: #{tpu_custom_call.1}
  #allocation0 [shape = 'u32[]', space=smem, size = 0x4, offset = 0x4, fixed_abs, tag = 'smem constant byte address 0x4 - core index']
  #allocation1 [shape = 'u32[144,128]{1,0:T(1,128)}', space=vmem, size = 0x12000, scoped, tag = 'internal scratch']
  %s0 = inlined_call_operand.hbm [shape: f32[2,64], index: 0, kind: input, shape index: {}]
  %s1 = inlined_call_operand.hbm [shape: f32[72,512], index: 1, kind: input, shape index: {}]
  %s2 = inlined_call_operand.hbm [shape: f32[520,128], index: 2, kind: input, shape index: {}]
  %s3 = inlined_call_operand.hbm [shape: f32[2,128], index: 3, kind: output, shape index: {}]
  %s4 = sld [smem:[#allocation0]]
  $region34: #{tpu_custom_call.1} parent=0
    _
  %s6 = ssub.s32 1, %s4
  %s7 = scalar_select 0, %s6, %s4
  $region1: #{tpu_custom_call.1} parent=0
    #allocation2 [shape = 'u8[1024]{0}', space=vmem, size = 0x400, scoped, tag = 'input window, operand 0, single buffered']
    #allocation3 [shape = 's32[1]{0}', space=sflag, size = 0x4, scoped, tag = 'scoped memory for tpu_custom_call.1']
    #allocation4 [shape = 's32[1]{0}', space=sflag, size = 0x4, scoped, tag = 'scoped memory for tpu_custom_call.1']
    #allocation5 [shape = 'u8[147456]{0}', space=vmem, size = 0x24000, scoped, tag = 'input window, operand 1, single buffered']
    #allocation6 [shape = 's32[1]{0}', space=sflag, size = 0x4, scoped, tag = 'scoped memory for tpu_custom_call.1']
    #allocation7 [shape = 'u8[266240]{0}', space=vmem, size = 0x41000, scoped, tag = 'input window, operand 2, single buffered']
    #allocation8 [shape = 'u8[1024]{0}', space=vmem, size = 0x400, scoped, tag = 'output window, operand 0, single buffered']
    %8 = vsyncpa [#allocation3], 0
    %9 = vsyncpa [#allocation6], 0
    %10 = vsyncpa [#allocation4], 0
    // Predicated region
    $region2: #{tpu_custom_call.1} parent=1 // pred_check
      _
    $region3: #{tpu_custom_call.1} parent=1 // pred_check_branch
      %12 = sbr.rel (0) target = $region5
    $region4: #{tpu_custom_call.1} parent=1 // pred_region
      %s14 = ssub.s32 32, 32
      %15 = vsyncadd [#allocation3], %s14
      %s17 = sshll.u32 [#allocation2], 4
      %s18 = int_to_ptr.vmem [resolvable:$true] %s17
      %20 = dma.hbm_to_vmem [thread:$0]  %s0, 32, %s18, [#allocation3]
    $region5: #{tpu_custom_call.1} parent=1 // pred_fallthru
      _
    // Predicated region
    $region6: #{tpu_custom_call.1} parent=1 // pred_check
      _
    $region7: #{tpu_custom_call.1} parent=1 // pred_check_branch
      %22 = sbr.rel (0) target = $region9
    $region8: #{tpu_custom_call.1} parent=1 // pred_region
      %s24 = ssub.s32 4608, 4608
      %25 = vsyncadd [#allocation6], %s24
      %s26 = sshll.u32 [#allocation5], 4
      %s27 = int_to_ptr.vmem [resolvable:$true] %s26
      %32 = dma.hbm_to_vmem [thread:$0]  %s1, 4608, %s27, [#allocation6], 512, 512, 32
    $region9: #{tpu_custom_call.1} parent=1 // pred_fallthru
      _
    // Predicated region
    $region10: #{tpu_custom_call.1} parent=1 // pred_check
      _
    $region11: #{tpu_custom_call.1} parent=1 // pred_check_branch
      %34 = sbr.rel (0) target = $region13
    $region12: #{tpu_custom_call.1} parent=1 // pred_region
      %s36 = ssub.s32 8320, 8320
      %37 = vsyncadd [#allocation6], %s36
      %s38 = sshll.u32 [#allocation7], 4
      %s39 = int_to_ptr.vmem [resolvable:$true] %s38
      %44 = dma.hbm_to_vmem [thread:$0]  %s2, 8320, %s39, [#allocation6], 128, 128, 8
    $region13: #{tpu_custom_call.1} parent=1 // pred_fallthru
      _
    // Predicated region
    $region14: #{tpu_custom_call.1} parent=1 // pred_check
      _
    $region15: #{tpu_custom_call.1} parent=1 // pred_check_branch
      %46 = sbr.rel (0) target = $region17
    $region16: #{tpu_custom_call.1} parent=1 // pred_region
      %47 = dma.done [#allocation3], 32
    $region17: #{tpu_custom_call.1} parent=1 // pred_fallthru
      _
    // Predicated region
    $region18: #{tpu_custom_call.1} parent=1 // pred_check
      _
    $region19: #{tpu_custom_call.1} parent=1 // pred_check_branch
      %49 = sbr.rel (0) target = $region21
    $region20: #{tpu_custom_call.1} parent=1 // pred_region
      %50 = dma.done [#allocation6], 4608
    $region21: #{tpu_custom_call.1} parent=1 // pred_fallthru
      _
    // Predicated region
    $region22: #{tpu_custom_call.1} parent=1 // pred_check
      _
    $region23: #{tpu_custom_call.1} parent=1 // pred_check_branch
      %52 = sbr.rel (0) target = $region25
    $region24: #{tpu_custom_call.1} parent=1 // pred_region
      %53 = dma.done [#allocation6], 8320
    $region25: #{tpu_custom_call.1} parent=1 // pred_fallthru
      _
    %v54 = vld [vmem:[#allocation5] sm:$0xff]
    %v55 = vld [vmem:[#allocation5 + $0x8] sm:$0xff]
    %v56 = vld [vmem:[#allocation5 + $0x10] sm:$0xff]
    %v57 = vld [vmem:[#allocation5 + $0x18] sm:$0xff]
    %v58 = vld [vmem:[#allocation5 + $0x20] sm:$0xff]
    %v59 = vld [vmem:[#allocation5 + $0x28] sm:$0xff]
    %v60 = vld [vmem:[#allocation5 + $0x30] sm:$0xff]
    %v61 = vld [vmem:[#allocation5 + $0x38] sm:$0xff]
    %v62 = vld [vmem:[#allocation5 + $0x40] sm:$0xff]
    %v63 = vld [vmem:[#allocation5 + $0x48] sm:$0xff]
    %v64 = vld [vmem:[#allocation5 + $0x50] sm:$0xff]
    %v65 = vld [vmem:[#allocation5 + $0x58] sm:$0xff]
    %v66 = vld [vmem:[#allocation5 + $0x60] sm:$0xff]
    %v67 = vld [vmem:[#allocation5 + $0x68] sm:$0xff]
    %v68 = vld [vmem:[#allocation5 + $0x70] sm:$0xff]
    %v69 = vld [vmem:[#allocation5 + $0x78] sm:$0xff]
    %v70 = vld [vmem:[#allocation5 + $0x80] sm:$0xff]
    %v71 = vld [vmem:[#allocation5 + $0x88] sm:$0xff]
    %v72 = vld [vmem:[#allocation5 + $0x90] sm:$0xff]
    %v73 = vld [vmem:[#allocation5 + $0x98] sm:$0xff]
    %v74 = vld [vmem:[#allocation5 + $0xa0] sm:$0xff]
    %v75 = vld [vmem:[#allocation5 + $0xa8] sm:$0xff]
    %v76 = vld [vmem:[#allocation5 + $0xb0] sm:$0xff]
    %v77 = vld [vmem:[#allocation5 + $0xb8] sm:$0xff]
    %v78 = vld [vmem:[#allocation5 + $0xc0] sm:$0xff]
    %v79 = vld [vmem:[#allocation5 + $0xc8] sm:$0xff]
    %v80 = vld [vmem:[#allocation5 + $0xd0] sm:$0xff]
    %v81 = vld [vmem:[#allocation5 + $0xd8] sm:$0xff]
    %v82 = vld [vmem:[#allocation5 + $0xe0] sm:$0xff]
    %v83 = vld [vmem:[#allocation5 + $0xe8] sm:$0xff]
    %v84 = vld [vmem:[#allocation5 + $0xf0] sm:$0xff]
    %v85 = vld [vmem:[#allocation5 + $0xf8] sm:$0xff]
    %s86 = scalar_lea.vmem [#allocation5], 256
    %v87 = vld [vmem:[%s86] ss:$8 sm:$0xf]
    %v88 = vld [vmem:[#allocation7] sm:$0xff]
    %v89 = vld [vmem:[#allocation7 + $0x8] sm:$0xff]
    %v90 = vld [vmem:[#allocation7 + $0x10] sm:$0xff]
    %v91 = vld [vmem:[#allocation7 + $0x18] sm:$0xff]
    %v92 = vld [vmem:[#allocation7 + $0x20] sm:$0xff]
    %v93 = vld [vmem:[#allocation7 + $0x28] sm:$0xff]
    %v94 = vld [vmem:[#allocation7 + $0x30] sm:$0xff]
    %v95 = vld [vmem:[#allocation7 + $0x38] sm:$0xff]
    %v96 = vld [vmem:[#allocation7 + $0x40] sm:$0xff]
    %v97 = vld [vmem:[#allocation7 + $0x48] sm:$0xff]
    %v98 = vld [vmem:[#allocation7 + $0x50] sm:$0xff]
    %v99 = vld [vmem:[#allocation7 + $0x58] sm:$0xff]
    %v100 = vld [vmem:[#allocation7 + $0x60] sm:$0xff]
    %v101 = vld [vmem:[#allocation7 + $0x68] sm:$0xff]
    %v102 = vld [vmem:[#allocation7 + $0x70] sm:$0xff]
    %v103 = vld [vmem:[#allocation7 + $0x78] sm:$0xff]
    %v104 = vld [vmem:[#allocation7 + $0x80] sm:$0xff]
    %v105 = vld [vmem:[#allocation7 + $0x88] sm:$0xff]
    %v106 = vld [vmem:[#allocation7 + $0x90] sm:$0xff]
    %v107 = vld [vmem:[#allocation7 + $0x98] sm:$0xff]
    %v108 = vld [vmem:[#allocation7 + $0xa0] sm:$0xff]
    %v109 = vld [vmem:[#allocation7 + $0xa8] sm:$0xff]
    %v110 = vld [vmem:[#allocation7 + $0xb0] sm:$0xff]
    %v111 = vld [vmem:[#allocation7 + $0xb8] sm:$0xff]
    %v112 = vld [vmem:[#allocation7 + $0xc0] sm:$0xff]
    %v113 = vld [vmem:[#allocation7 + $0xc8] sm:$0xff]
    %v114 = vld [vmem:[#allocation7 + $0xd0] sm:$0xff]
    %v115 = vld [vmem:[#allocation7 + $0xd8] sm:$0xff]
    %v116 = vld [vmem:[#allocation7 + $0xe0] sm:$0xff]
    %v117 = vld [vmem:[#allocation7 + $0xe8] sm:$0xff]
    %v118 = vld [vmem:[#allocation7 + $0xf0] sm:$0xff]
    %v119 = vld [vmem:[#allocation7 + $0xf8] sm:$0xff]
    %v120 = vld [vmem:[#allocation7 + $0x100] sm:$0xff]
    %v121 = vld [vmem:[#allocation7 + $0x108] sm:$0xff]
    %v122 = vld [vmem:[#allocation7 + $0x110] sm:$0xff]
    %v123 = vld [vmem:[#allocation7 + $0x118] sm:$0xff]
    %v124 = vld [vmem:[#allocation7 + $0x120] sm:$0xff]
    %v125 = vld [vmem:[#allocation7 + $0x128] sm:$0xff]
    %v126 = vld [vmem:[#allocation7 + $0x130] sm:$0xff]
    %v127 = vld [vmem:[#allocation7 + $0x138] sm:$0xff]
    %v128 = vld [vmem:[#allocation7 + $0x140] sm:$0xff]
    %v129 = vld [vmem:[#allocation7 + $0x148] sm:$0xff]
    %v130 = vld [vmem:[#allocation7 + $0x150] sm:$0xff]
    %v131 = vld [vmem:[#allocation7 + $0x158] sm:$0xff]
    %v132 = vld [vmem:[#allocation7 + $0x160] sm:$0xff]
    %v133 = vld [vmem:[#allocation7 + $0x168] sm:$0xff]
    %v134 = vld [vmem:[#allocation7 + $0x170] sm:$0xff]
    %v135 = vld [vmem:[#allocation7 + $0x178] sm:$0xff]
    %v136 = vld [vmem:[#allocation7 + $0x180] sm:$0xff]
    %v137 = vld [vmem:[#allocation7 + $0x188] sm:$0xff]
    %v138 = vld [vmem:[#allocation7 + $0x190] sm:$0xff]
    %v139 = vld [vmem:[#allocation7 + $0x198] sm:$0xff]
    %v140 = vld [vmem:[#allocation7 + $0x1a0] sm:$0xff]
    %v141 = vld [vmem:[#allocation7 + $0x1a8] sm:$0xff]
    %v142 = vld [vmem:[#allocation7 + $0x1b0] sm:$0xff]
    %v143 = vld [vmem:[#allocation7 + $0x1b8] sm:$0xff]
    %v144 = vld [vmem:[#allocation7 + $0x1c0] sm:$0xff]
    %v145 = vld [vmem:[#allocation7 + $0x1c8] sm:$0xff]
    %v146 = vld [vmem:[#allocation7 + $0x1d0] sm:$0xff]
    %v147 = vld [vmem:[#allocation7 + $0x1d8] sm:$0xff]
    %v148 = vld [vmem:[#allocation7 + $0x1e0] sm:$0xff]
    %v149 = vld [vmem:[#allocation7 + $0x1e8] sm:$0xff]
    %v150 = vld [vmem:[#allocation7 + $0x1f0] sm:$0xff]
    %v151 = vld [vmem:[#allocation7 + $0x1f8] sm:$0xff]
    %v152 = vld [vmem:[#allocation7 + $0x200] sm:$0x1]
    %v153 = vld [vmem:[#allocation2] sm:$0x3]
    %v155 = vlaneseq
    %v156 = vshrl.u32 %v155, 7
    %v157 = vsub.s32 0, %v156
    %v158 = vrot.slane %v87, %v157
    %v159 = vlaneseq
    %v160 = vshrl.u32 %v159, 7
    %v161 = vsub.s32 1, %v160
    %v162 = vrot.slane %v87, %v161
    %v163 = vlaneseq
    %v164 = vshrl.u32 %v163, 7
    %v165 = vsub.s32 2, %v164
    %v166 = vrot.slane %v87, %v165
    %v167 = vlaneseq
    %v168 = vshrl.u32 %v167, 7
    %v169 = vsub.s32 3, %v168
    %v170 = vrot.slane %v87, %v169
    %vm175 = vcmask 523264
    %v177 = vsel %vm175, %v153, 0
    %179 = vmatprep.subr.mxu0 0.0
    %180 = vmatpush1.msra.mxu0 0.0
    %181 = vmatprep.subr.mxu0 0.0
    %182 = vmatpush1.msra.mxu0 0.0
    %183 = vmatprep.subr.mxu0 0.0
    %184 = vmatpush1.msra.mxu0 0.0
    %185 = vmatprep.subr.mxu0 0.0
    %186 = vmatpush1.msra.mxu0 0.0
    %187 = vmatprep.subr.mxu0 0.0
    %188 = vmatpush1.msra.mxu0 0.0
    %189 = vmatprep.subr.mxu0 0.0
    %190 = vmatpush1.msra.mxu0 0.0
    %191 = vmatprep.subr.mxu0 0.0
    %192 = vmatpush1.msra.mxu0 0.0
    %193 = vmatprep.subr.mxu0 0.0
    %194 = vmatpush1.msra.mxu0 0.0
    %195 = vmatprep.subr.mxu0 %v83
    %196 = vmatpush1.msra.mxu0 %v82
    %197 = vmatprep.subr.mxu0 %v79
    %198 = vmatpush1.msra.mxu0 %v78
    %199 = vmatprep.subr.mxu0 %v75
    %200 = vmatpush1.msra.mxu0 %v74
    %201 = vmatprep.subr.mxu0 %v71
    %202 = vmatpush1.msra.mxu0 %v70
    %203 = vmatprep.subr.mxu0 %v67
    %204 = vmatpush1.msra.mxu0 %v66
    %205 = vmatprep.subr.mxu0 %v63
    %206 = vmatpush1.msra.mxu0 %v62
    %207 = vmatprep.subr.mxu0 %v59
    %208 = vmatpush1.msra.mxu0 %v58
    %209 = vmatprep.subr.mxu0 %v55
    %210 = vmatpush1.msra.mxu0 %v54
    %211 = vmatprep.subr.mxu0 0.0
    %212 = vmatpush2.msra.mxu0 0.0
    %213 = vmatprep.subr.mxu0 0.0
    %214 = vmatpush2.msra.mxu0 0.0
    %215 = vmatprep.subr.mxu0 0.0
    %216 = vmatpush2.msra.mxu0 0.0
    %217 = vmatprep.subr.mxu0 0.0
    %218 = vmatpush2.msra.mxu0 0.0
    %219 = vmatprep.subr.mxu0 0.0
    %220 = vmatpush2.msra.mxu0 0.0
    %221 = vmatprep.subr.mxu0 0.0
    %222 = vmatpush2.msra.mxu0 0.0
    %223 = vmatprep.subr.mxu0 0.0
    %224 = vmatpush2.msra.mxu0 0.0
    %225 = vmatprep.subr.mxu0 0.0
    %226 = vmatpush2.msra.mxu0 0.0
    %227 = vmatprep.subr.mxu0 0.0
    %228 = vmatpush2.msra.mxu0 0.0
    %229 = vmatprep.subr.mxu0 0.0
    %230 = vmatpush2.msra.mxu0 0.0
    %231 = vmatprep.subr.mxu0 0.0
    %232 = vmatpush2.msra.mxu0 0.0
    %233 = vmatprep.subr.mxu0 0.0
    %234 = vmatpush2.msra.mxu0 0.0
    %235 = vmatprep.subr.mxu0 0.0
    %236 = vmatpush2.msra.mxu0 0.0
    %237 = vmatprep.subr.mxu0 0.0
    %238 = vmatpush2.msra.mxu0 0.0
    %239 = vmatprep.subr.mxu0 0.0
    %240 = vmatpush2.msra.mxu0 0.0
    %241 = vmatprep.subr.mxu0 0.0
    %242 = vmatpush2.msra.mxu0 0.0
    %243 = vmatprep.mubr.f32.mxu0 0.0
    %244 = vmatmul.mubr.f32.gmra.mxu0 %v177
    %v245 = vpop.f32.mrf.mxu0
    %v246 = vadd.f32 %v158, %v245
    %v247 = vpop.f32.mrf.mxu0
    %v248 = vadd.f32 %v162, %v247
    %249 = vdwg.mxu0
    %250 = vmatprep.subr.mxu0 0.0
    %251 = vmatpush1.msra.mxu0 0.0
    %252 = vmatprep.subr.mxu0 0.0
    %253 = vmatpush1.msra.mxu0 0.0
    %254 = vmatprep.subr.mxu0 0.0
    %255 = vmatpush1.msra.mxu0 0.0
    %256 = vmatprep.subr.mxu0 0.0
    %257 = vmatpush1.msra.mxu0 0.0
    %258 = vmatprep.subr.mxu0 0.0
    %259 = vmatpush1.msra.mxu0 0.0
    %260 = vmatprep.subr.mxu0 0.0
    %261 = vmatpush1.msra.mxu0 0.0
    %262 = vmatprep.subr.mxu0 0.0
    %263 = vmatpush1.msra.mxu0 0.0
    %264 = vmatprep.subr.mxu0 0.0
    %265 = vmatpush1.msra.mxu0 0.0
    %266 = vmatprep.subr.mxu0 %v85
    %267 = vmatpush1.msra.mxu0 %v84
    %268 = vmatprep.subr.mxu0 %v81
    %269 = vmatpush1.msra.mxu0 %v80
    %270 = vmatprep.subr.mxu0 %v77
    %271 = vmatpush1.msra.mxu0 %v76
    %272 = vmatprep.subr.mxu0 %v73
    %273 = vmatpush1.msra.mxu0 %v72
    %274 = vmatprep.subr.mxu0 %v69
    %275 = vmatpush1.msra.mxu0 %v68
    %276 = vmatprep.subr.mxu0 %v65
    %277 = vmatpush1.msra.mxu0 %v64
    %278 = vmatprep.subr.mxu0 %v61
    %279 = vmatpush1.msra.mxu0 %v60
    %280 = vmatprep.subr.mxu0 %v57
    %281 = vmatpush1.msra.mxu0 %v56
    %282 = vmatprep.subr.mxu0 0.0
    %283 = vmatpush2.msra.mxu0 0.0
    %284 = vmatprep.subr.mxu0 0.0
    %285 = vmatpush2.msra.mxu0 0.0
    %286 = vmatprep.subr.mxu0 0.0
    %287 = vmatpush2.msra.mxu0 0.0
    %288 = vmatprep.subr.mxu0 0.0
    %289 = vmatpush2.msra.mxu0 0.0
    %290 = vmatprep.subr.mxu0 0.0
    %291 = vmatpush2.msra.mxu0 0.0
    %292 = vmatprep.subr.mxu0 0.0
    %293 = vmatpush2.msra.mxu0 0.0
    %294 = vmatprep.subr.mxu0 0.0
    %295 = vmatpush2.msra.mxu0 0.0
    %296 = vmatprep.subr.mxu0 0.0
    %297 = vmatpush2.msra.mxu0 0.0
    %298 = vmatprep.subr.mxu0 0.0
    %299 = vmatpush2.msra.mxu0 0.0
    %300 = vmatprep.subr.mxu0 0.0
    %301 = vmatpush2.msra.mxu0 0.0
    %302 = vmatprep.subr.mxu0 0.0
    %303 = vmatpush2.msra.mxu0 0.0
    %304 = vmatprep.subr.mxu0 0.0
    %305 = vmatpush2.msra.mxu0 0.0
    %306 = vmatprep.subr.mxu0 0.0
    %307 = vmatpush2.msra.mxu0 0.0
    %308 = vmatprep.subr.mxu0 0.0
    %309 = vmatpush2.msra.mxu0 0.0
    %310 = vmatprep.subr.mxu0 0.0
    %311 = vmatpush2.msra.mxu0 0.0
    %312 = vmatprep.subr.mxu0 0.0
    %313 = vmatpush2.msra.mxu0 0.0
    %314 = vmatprep.mubr.f32.mxu0 0.0
    %315 = vmatmul.mubr.f32.gmra.mxu0 %v177
    %v316 = vpop.f32.mrf.mxu0
    %v317 = vadd.f32 %v166, %v316
    %v318 = vpop.f32.mrf.mxu0
    %v319 = vadd.f32 %v170, %v318
    %320 = vdwg.mxu0
    %v321 = vxor.u32 %v246, 2147483648
    %v322 = vxor.u32 %v248, 2147483648
    %v323 = vxor.u32 %v317, 2147483648
    %v324 = vxor.u32 %v319, 2147483648
    %v325 = vmul.f32 %v321, 1.442695
    %v326 = vpow.pop %v325
    %v327 = vmul.f32 %v322, 1.442695
    %v328 = vpow.pop %v327
    %v329 = vmul.f32 %v323, 1.442695
    %v330 = vpow.pop %v329
    %v331 = vmul.f32 %v324, 1.442695
    %v332 = vpow.pop %v331
    %v333 = vadd.f32 %v326, 1.0
    %v334 = vadd.f32 %v328, 1.0
    %v335 = vadd.f32 %v330, 1.0
    %v336 = vadd.f32 %v332, 1.0
    %v337 = vrcp.pop %v333
    %v338 = vmul.f32 1.0, %v337
    %v339 = vrcp.pop %v334
    %v340 = vmul.f32 1.0, %v339
    %v341 = vrcp.pop %v335
    %v342 = vmul.f32 1.0, %v341
    %v343 = vrcp.pop %v336
    %v344 = vmul.f32 1.0, %v343
    %v345 = vmul.f32 %v246, %v338
    %v346 = vmul.f32 %v248, %v340
    %v347 = vmul.f32 %v317, %v342
    %v348 = vmul.f32 %v319, %v344
    %v349 = vlaneseq
    %v350 = vshrl.u32 %v349, 7
    %v351 = vsub.s32 0, %v350
    %v352 = vrot.slane %v152, %v351
    %353 = vmatprep.subr.mxu0 0.0
    %354 = vmatpush1.msra.mxu0 %v103
    %355 = vmatprep.subr.mxu0 0.0
    %356 = vmatpush1.msra.mxu0 %v102
    %357 = vmatprep.subr.mxu0 0.0
    %358 = vmatpush1.msra.mxu0 %v101
    %359 = vmatprep.subr.mxu0 0.0
    %360 = vmatpush1.msra.mxu0 %v100
    %361 = vmatprep.subr.mxu0 0.0
    %362 = vmatpush1.msra.mxu0 %v99
    %363 = vmatprep.subr.mxu0 0.0
    %364 = vmatpush1.msra.mxu0 %v98
    %365 = vmatprep.subr.mxu0 0.0
    %366 = vmatpush1.msra.mxu0 %v97
    %367 = vmatprep.subr.mxu0 0.0
    %368 = vmatpush1.msra.mxu0 %v96
    %369 = vmatprep.subr.mxu0 0.0
    %370 = vmatpush1.msra.mxu0 %v95
    %371 = vmatprep.subr.mxu0 0.0
    %372 = vmatpush1.msra.mxu0 %v94
    %373 = vmatprep.subr.mxu0 0.0
    %374 = vmatpush1.msra.mxu0 %v93
    %375 = vmatprep.subr.mxu0 0.0
    %376 = vmatpush1.msra.mxu0 %v92
    %377 = vmatprep.subr.mxu0 0.0
    %378 = vmatpush1.msra.mxu0 %v91
    %379 = vmatprep.subr.mxu0 0.0
    %380 = vmatpush1.msra.mxu0 %v90
    %381 = vmatprep.subr.mxu0 0.0
    %382 = vmatpush1.msra.mxu0 %v89
    %383 = vmatprep.subr.mxu0 0.0
    %384 = vmatpush1.msra.mxu0 %v88
    %385 = vmatprep.subr.mxu0 0.0
    %386 = vmatpush2.msra.mxu0 %v119
    %387 = vmatprep.subr.mxu0 0.0
    %388 = vmatpush2.msra.mxu0 %v118
    %389 = vmatprep.subr.mxu0 0.0
    %390 = vmatpush2.msra.mxu0 %v117
    %391 = vmatprep.subr.mxu0 0.0
    %392 = vmatpush2.msra.mxu0 %v116
    %393 = vmatprep.subr.mxu0 0.0
    %394 = vmatpush2.msra.mxu0 %v115
    %395 = vmatprep.subr.mxu0 0.0
    %396 = vmatpush2.msra.mxu0 %v114
    %397 = vmatprep.subr.mxu0 0.0
    %398 = vmatpush2.msra.mxu0 %v113
    %399 = vmatprep.subr.mxu0 0.0
    %400 = vmatpush2.msra.mxu0 %v112
    %401 = vmatprep.subr.mxu0 0.0
    %402 = vmatpush2.msra.mxu0 %v111
    %403 = vmatprep.subr.mxu0 0.0
    %404 = vmatpush2.msra.mxu0 %v110
    %405 = vmatprep.subr.mxu0 0.0
    %406 = vmatpush2.msra.mxu0 %v109
    %407 = vmatprep.subr.mxu0 0.0
    %408 = vmatpush2.msra.mxu0 %v108
    %409 = vmatprep.subr.mxu0 0.0
    %410 = vmatpush2.msra.mxu0 %v107
    %411 = vmatprep.subr.mxu0 0.0
    %412 = vmatpush2.msra.mxu0 %v106
    %413 = vmatprep.subr.mxu0 0.0
    %414 = vmatpush2.msra.mxu0 %v105
    %415 = vmatprep.subr.mxu0 0.0
    %416 = vmatpush2.msra.mxu0 %v104
    %417 = vmatprep.mubr.f32.mxu0 %v346
    %418 = vmatmul.mubr.f32.gmra.mxu0 %v345
    %v419 = vpop.f32.mrf.mxu0
    %v420 = vadd.f32 %v352, %v419
    %v421 = vpop.f32.mrf.mxu0
    %422 = vdwg.mxu0
    %423 = vmatprep.subr.mxu0 0.0
    %424 = vmatpush1.msra.mxu0 %v135
    %425 = vmatprep.subr.mxu0 0.0
    %426 = vmatpush1.msra.mxu0 %v134
    %427 = vmatprep.subr.mxu0 0.0
    %428 = vmatpush1.msra.mxu0 %v133
    %429 = vmatprep.subr.mxu0 0.0
    %430 = vmatpush1.msra.mxu0 %v132
    %431 = vmatprep.subr.mxu0 0.0
    %432 = vmatpush1.msra.mxu0 %v131
    %433 = vmatprep.subr.mxu0 0.0
    %434 = vmatpush1.msra.mxu0 %v130
    %435 = vmatprep.subr.mxu0 0.0
    %436 = vmatpush1.msra.mxu0 %v129
    %437 = vmatprep.subr.mxu0 0.0
    %438 = vmatpush1.msra.mxu0 %v128
    %439 = vmatprep.subr.mxu0 0.0
    %440 = vmatpush1.msra.mxu0 %v127
    %441 = vmatprep.subr.mxu0 0.0
    %442 = vmatpush1.msra.mxu0 %v126
    %443 = vmatprep.subr.mxu0 0.0
    %444 = vmatpush1.msra.mxu0 %v125
    %445 = vmatprep.subr.mxu0 0.0
    %446 = vmatpush1.msra.mxu0 %v124
    %447 = vmatprep.subr.mxu0 0.0
    %448 = vmatpush1.msra.mxu0 %v123
    %449 = vmatprep.subr.mxu0 0.0
    %450 = vmatpush1.msra.mxu0 %v122
    %451 = vmatprep.subr.mxu0 0.0
    %452 = vmatpush1.msra.mxu0 %v121
    %453 = vmatprep.subr.mxu0 0.0
    %454 = vmatpush1.msra.mxu0 %v120
    %455 = vmatprep.subr.mxu0 0.0
    %456 = vmatpush2.msra.mxu0 %v151
    %457 = vmatprep.subr.mxu0 0.0
    %458 = vmatpush2.msra.mxu0 %v150
    %459 = vmatprep.subr.mxu0 0.0
    %460 = vmatpush2.msra.mxu0 %v149
    %461 = vmatprep.subr.mxu0 0.0
    %462 = vmatpush2.msra.mxu0 %v148
    %463 = vmatprep.subr.mxu0 0.0
    %464 = vmatpush2.msra.mxu0 %v147
    %465 = vmatprep.subr.mxu0 0.0
    %466 = vmatpush2.msra.mxu0 %v146
    %467 = vmatprep.subr.mxu0 0.0
    %468 = vmatpush2.msra.mxu0 %v145
    %469 = vmatprep.subr.mxu0 0.0
    %470 = vmatpush2.msra.mxu0 %v144
    %471 = vmatprep.subr.mxu0 0.0
    %472 = vmatpush2.msra.mxu0 %v143
    %473 = vmatprep.subr.mxu0 0.0
    %474 = vmatpush2.msra.mxu0 %v142
    %475 = vmatprep.subr.mxu0 0.0
    %476 = vmatpush2.msra.mxu0 %v141
    %477 = vmatprep.subr.mxu0 0.0
    %478 = vmatpush2.msra.mxu0 %v140
    %479 = vmatprep.subr.mxu0 0.0
    %480 = vmatpush2.msra.mxu0 %v139
    %481 = vmatprep.subr.mxu0 0.0
    %482 = vmatpush2.msra.mxu0 %v138
    %483 = vmatprep.subr.mxu0 0.0
    %484 = vmatpush2.msra.mxu0 %v137
    %485 = vmatprep.subr.mxu0 0.0
    %486 = vmatpush2.msra.mxu0 %v136
    %487 = vmatprep.mubr.f32.mxu0 %v348
    %488 = vmatmul.mubr.f32.gmra.mxu0 %v347
    %v489 = vpop.f32.mrf.mxu0
    %v490 = vadd.f32 %v420, %v489
    %v491 = vpop.f32.mrf.mxu0
    %492 = vdwg.mxu0
    %493 = vst [vmem:[#allocation8] sm:$0x3] %v490
    // Predicated region
    $region26: #{tpu_custom_call.1} parent=1 // pred_check
      _
    $region27: #{tpu_custom_call.1} parent=1 // pred_check_branch
      %495 = sbr.rel (0) target = $region29
    $region28: #{tpu_custom_call.1} parent=1 // pred_region
      %s497 = ssub.s32 32, 32
      %498 = vsyncadd [#allocation4], %s497
      %s500 = sshll.u32 [#allocation8], 4
      %s501 = int_to_ptr.vmem [resolvable:$true] %s500
      %503 = dma.vmem_to_hbm [thread:$0]  %s501, 32, %s3, [#allocation4]
    $region29: #{tpu_custom_call.1} parent=1 // pred_fallthru
      _
    // Predicated region
    $region30: #{tpu_custom_call.1} parent=1 // pred_check
      _
    $region31: #{tpu_custom_call.1} parent=1 // pred_check_branch
      %505 = sbr.rel (0) target = $region33
    $region32: #{tpu_custom_call.1} parent=1 // pred_region
      %506 = dma.done [#allocation4], 32
    $region33: #{tpu_custom_call.1} parent=1 // pred_fallthru
      _
    %507 = vsyncpa [#allocation3], 1
    %508 = vsyncpa [#allocation6], 1
    %509 = vsyncpa [#allocation4], 1

</llo_original>
